<compile_context>
chip_gen: v5e
topology: v5e:2x2
jax: 0.10.0
libtpu: 0.0.40
codegen_flags: <defaults>
</compile_context>

<pallas_src>
import jax
import jax.numpy as jnp
from jax import lax
from jax.experimental import pallas as pl
from jax.experimental.pallas import tpu as pltpu

MARGIN = 0.5  # opts-independent: the module hard-codes self.cur_margin = 0.5


def _smoothed_metric_loss(X):
    """Song et al. lifted-structure loss on (N, E) embeddings; rows (2p, 2p+1) form a pair."""
    N = X.shape[0]
    # D = X @ X^T, transpose-free: contract last dim against last dim, f32 accumulation on MXU.
    D = lax.dot_general(X, X, dimension_numbers=(((1,), (1,)), ((), ())),
                        preferred_element_type=jnp.float32)                   # (N, N) f32
    expmD = jnp.exp(MARGIN + D)                                               # EUP

    # pair_xor[r, c] = r ^ c: 0 on the diagonal, 1 for the in-pair partner, >= 2 otherwise.
    ri = lax.broadcasted_iota(jnp.int32, (N, 1), 0)
    ci = lax.broadcasted_iota(jnp.int32, (1, N), 1)
    pair_xor = ri ^ ci                                                        # (N, N) via broadcast
    same_pair = pair_xor < 2

    # Negative sum per column: expmD summed over rows outside that column's pair.
    # expmD is symmetric, so this equals the per-row negative sum.
    cs = jnp.sum(jnp.where(same_pair, 0.0, expmD), axis=0, keepdims=True)     # (1, N)
    # S_row[i] = cs[i] + cs[i^1]  -> the pair's total negative sum, same for both rows of p.
    S_row = jnp.sum(jnp.where(same_pair, cs, 0.0), axis=1, keepdims=True)     # (N, 1)
    # D_off[i] = D[i, i^1] via a single (r ^ c == 1) select (D symmetric).
    D_off = jnp.sum(jnp.where(pair_xor == 1, D, 0.0), axis=1, keepdims=True)  # (N, 1)

    J_row = jnp.square(jnp.maximum(jnp.log(S_row) - D_off, 0.0))              # each pair counted twice
    # loss = mean_p(J_p) / 2 = sum_rows(J_row) / (2 * N)
    return jnp.sum(J_row) / (2.0 * N)


def metric_loss_kernel(text_ref, shape_rep_ref, out_ref):
    X_text = text_ref[...]        # native dtype (f32 or bf16); MXU accumulates in f32
    X_shape = shape_rep_ref[...]
    N, E = X_text.shape

    # metric_tt_loss: text vs text.
    loss_tt = _smoothed_metric_loss(X_text)

    # Combined embedding: even rows take text, odd rows take the repeated shape embedding.
    rows = lax.broadcasted_iota(jnp.int32, (N, E), 0)
    combined = jnp.where((rows & 1) == 0, X_text, X_shape)
    loss_st = _smoothed_metric_loss(combined)

    out_ref[0, 0] = loss_tt + 2.0 * loss_st


def metric_loss(text_embeddings, shape_embeddings):
    """text_embeddings: (N, E); shape_embeddings: (N//2, E). Returns the scalar total loss."""
    N, E = text_embeddings.shape
    H, E2 = shape_embeddings.shape
    assert E2 == E and 2 * H == N

    # torch.index_select with indices [i // 2] == repeat each shape embedding twice.
    # TODO(synk): fold this repeat into the kernel (strided sublane read of the (N/2, E) ref)
    # to halve the second input's DMA; kept host-side here for lowering robustness.
    shape_rep = jnp.repeat(shape_embeddings, 2, axis=0).astype(text_embeddings.dtype)

    # Scoped-VMEM limit sized to the actual working set (inputs + a few (N, N) f32 temps).
    itemsize = jnp.dtype(text_embeddings.dtype).itemsize
    est = 6 * N * E * itemsize + 8 * N * N * 4 + (4 << 20)
    vmem_limit = int(min(max(est, 16 << 20), 64 << 20))

    out = pl.pallas_call(
        metric_loss_kernel,
        out_shape=jax.ShapeDtypeStruct((1, 1), jnp.float32),
        in_specs=[
            pl.BlockSpec(memory_space=pltpu.MemorySpace.VMEM),
            pl.BlockSpec(memory_space=pltpu.MemorySpace.VMEM),
        ],
        out_specs=pl.BlockSpec(memory_space=pltpu.MemorySpace.SMEM),
        compiler_params=pltpu.CompilerParams(vmem_limit_bytes=vmem_limit),
    )(text_embeddings, shape_rep)
    # TODO(synk): for very large N (>~1.5K f32 rows) the resident (N, N) tiles exceed v7x's
    # 64 MiB VMEM; that regime needs a row-block grid instead of this single-shot kernel.
    return out[0, 0]


# ---------------- pure-JAX reference (mirrors the PyTorch loops) ----------------
def _ref_smoothed(X):
    N = X.shape[0]
    D = X @ X.T
    expmD = jnp.exp(MARGIN + D)
    J = []
    for p in range(N // 2):
        i, j = 2 * p, 2 * p + 1
        rest = [k for k in range(N) if k not in (i, j)]
        s = sum(expmD[i, k] for k in rest) + sum(expmD[j, k] for k in rest)
        J.append(jnp.square(jnp.maximum(jnp.log(s) - D[i, j], 0.0)))
    return jnp.mean(jnp.stack(J)) / 2.0


def _ref_metric_loss(text, shape):
    N, E = text.shape
    shape_rep = jnp.repeat(shape, 2, axis=0)
    loss_tt = _ref_smoothed(text)
    mask = jnp.tile(jnp.array([1.0, 0.0]), N // 2)[:, None]
    combined = text * mask + shape_rep * (1.0 - mask)
    loss_st = _ref_smoothed(combined)
    return loss_tt + 2.0 * loss_st


if __name__ == "__main__":
    key = jax.random.PRNGKey(0)
    k1, k2 = jax.random.split(key)
    N, E = 8, 32                                   # batch=8 captions (4 models x 2), emb=32
    text_embeddings = jax.random.normal(k1, (N, E), dtype=jnp.float32) * 0.1
    shape_embeddings = jax.random.normal(k2, (N // 2, E), dtype=jnp.float32) * 0.1

    loss = metric_loss(text_embeddings, shape_embeddings)
    jax.block_until_ready(loss)

    ref = _ref_metric_loss(text_embeddings, shape_embeddings)
    assert jnp.allclose(loss, ref, rtol=1e-3, atol=1e-4), (loss, ref)

    print("KERNEL_OK")
</pallas_src>

<mosaic_0001>
module attributes {stable_mosaic.version = 11 : i64} {
  func.func @metric_loss_kernel(%arg0: memref<8x32xf32, #tpu.memory_space<vmem>>, %arg1: memref<8x32xf32, #tpu.memory_space<vmem>>, %arg2: memref<1x1xf32, #tpu.memory_space<smem>>) attributes {dimension_semantics = [], scalar_prefetch = 0 : i64, scratch_operands = 0 : i64, tpu.core_type = #tpu.core_type<tc>} {
    %c0 = arith.constant 0 : index
    %c0_0 = arith.constant 0 : index
    %0 = vector.load %arg0[%c0, %c0_0] : memref<8x32xf32, #tpu.memory_space<vmem>>, vector<8x32xf32>
    %c0_1 = arith.constant 0 : index
    %c0_2 = arith.constant 0 : index
    %1 = vector.load %arg1[%c0_1, %c0_2] : memref<8x32xf32, #tpu.memory_space<vmem>>, vector<8x32xf32>
    %cst = arith.constant dense<0.000000e+00> : vector<8x8xf32>
    %2 = tpu.matmul %0, %0, %cst {dimension_numbers = #tpu.dot_dimension_numbers<[1], [1], [0], [0], [0, 0, 1, 0], [], []>} : vector<8x32xf32>, vector<8x32xf32>, vector<8x8xf32> -> vector<8x8xf32>
    %cst_3 = arith.constant 5.000000e-01 : f32
    %3 = vector.broadcast %cst_3 : f32 to vector<8x8xf32>
    %4 = arith.addf %3, %2 : vector<8x8xf32>
    %5 = math.exp %4 : vector<8x8xf32>
    %6 = tpu.iota {dimensions = array<i32: 0>} : vector<8x1xi32>
    %7 = tpu.iota {dimensions = array<i32: 1>} : vector<1x8xi32>
    %8 = vector.broadcast %6 : vector<8x1xi32> to vector<8x8xi32>
    %9 = vector.broadcast %7 : vector<1x8xi32> to vector<8x8xi32>
    %10 = arith.xori %8, %9 : vector<8x8xi32>
    %c2_i32 = arith.constant 2 : i32
    %11 = vector.broadcast %c2_i32 : i32 to vector<8x8xi32>
    %12 = arith.cmpi slt, %10, %11 : vector<8x8xi32>
    %cst_4 = arith.constant 0.000000e+00 : f32
    %13 = vector.broadcast %cst_4 : f32 to vector<8x8xf32>
    %14 = arith.select %12, %13, %5 : vector<8x8xi1>, vector<8x8xf32>
    %cst_5 = arith.constant dense<0.000000e+00> : vector<8xf32>
    %15 = vector.multi_reduction <add>, %14, %cst_5 [0] : vector<8x8xf32> to vector<8xf32>
    %16 = vector.shape_cast %15 : vector<8xf32> to vector<1x8xf32>
    %cst_6 = arith.constant 0.000000e+00 : f32
    %17 = vector.shape_cast %16 : vector<1x8xf32> to vector<1x8xf32>
    %18 = vector.broadcast %17 : vector<1x8xf32> to vector<8x8xf32>
    %19 = vector.broadcast %cst_6 : f32 to vector<8x8xf32>
    %20 = arith.select %12, %18, %19 : vector<8x8xi1>, vector<8x8xf32>
    %cst_7 = arith.constant dense<0.000000e+00> : vector<8xf32>
    %21 = vector.multi_reduction <add>, %20, %cst_7 [1] : vector<8x8xf32> to vector<8xf32>
    %22 = vector.shape_cast %21 : vector<8xf32> to vector<8x1xf32>
    %c1_i32 = arith.constant 1 : i32
    %23 = vector.broadcast %c1_i32 : i32 to vector<8x8xi32>
    %24 = arith.cmpi eq, %10, %23 : vector<8x8xi32>
    %cst_8 = arith.constant 0.000000e+00 : f32
    %25 = vector.broadcast %cst_8 : f32 to vector<8x8xf32>
    %26 = arith.select %24, %2, %25 : vector<8x8xi1>, vector<8x8xf32>
    %cst_9 = arith.constant dense<0.000000e+00> : vector<8xf32>
    %27 = vector.multi_reduction <add>, %26, %cst_9 [1] : vector<8x8xf32> to vector<8xf32>
    %28 = vector.shape_cast %27 : vector<8xf32> to vector<8x1xf32>
    %29 = math.log %22 : vector<8x1xf32>
    %30 = arith.subf %29, %28 : vector<8x1xf32>
    %cst_10 = arith.constant 0.000000e+00 : f32
    %31 = vector.broadcast %cst_10 : f32 to vector<8x1xf32>
    %32 = arith.maximumf %30, %31 : vector<8x1xf32>
    %33 = arith.mulf %32, %32 : vector<8x1xf32>
    %34 = vector.shape_cast %33 : vector<8x1xf32> to vector<1x8x1xf32>
    %cst_11 = arith.constant dense<0.000000e+00> : vector<1xf32>
    %35 = vector.multi_reduction <add>, %34, %cst_11 [1, 2] : vector<1x8x1xf32> to vector<1xf32>
    %36 = vector.shape_cast %35 : vector<1xf32> to vector<1x1x1xf32>
    %37 = vector.extract %36[0, 0, 0] : f32 from vector<1x1x1xf32>
    %cst_12 = arith.constant 1.600000e+01 : f32
    %38 = arith.divf %37, %cst_12 : f32
    %39 = tpu.iota {dimensions = array<i32: 0>} : vector<8x32xi32>
    %c1_i32_13 = arith.constant 1 : i32
    %40 = vector.broadcast %c1_i32_13 : i32 to vector<8x32xi32>
    %41 = arith.andi %39, %40 : vector<8x32xi32>
    %c0_i32 = arith.constant 0 : i32
    %42 = vector.broadcast %c0_i32 : i32 to vector<8x32xi32>
    %43 = arith.cmpi eq, %41, %42 : vector<8x32xi32>
    %44 = arith.select %43, %0, %1 : vector<8x32xi1>, vector<8x32xf32>
    %cst_14 = arith.constant dense<0.000000e+00> : vector<8x8xf32>
    %45 = tpu.matmul %44, %44, %cst_14 {dimension_numbers = #tpu.dot_dimension_numbers<[1], [1], [0], [0], [0, 0, 1, 0], [], []>} : vector<8x32xf32>, vector<8x32xf32>, vector<8x8xf32> -> vector<8x8xf32>
    %cst_15 = arith.constant 5.000000e-01 : f32
    %46 = vector.broadcast %cst_15 : f32 to vector<8x8xf32>
    %47 = arith.addf %46, %45 : vector<8x8xf32>
    %48 = math.exp %47 : vector<8x8xf32>
    %49 = tpu.iota {dimensions = array<i32: 0>} : vector<8x1xi32>
    %50 = tpu.iota {dimensions = array<i32: 1>} : vector<1x8xi32>
    %51 = vector.broadcast %49 : vector<8x1xi32> to vector<8x8xi32>
    %52 = vector.broadcast %50 : vector<1x8xi32> to vector<8x8xi32>
    %53 = arith.xori %51, %52 : vector<8x8xi32>
    %c2_i32_16 = arith.constant 2 : i32
    %54 = vector.broadcast %c2_i32_16 : i32 to vector<8x8xi32>
    %55 = arith.cmpi slt, %53, %54 : vector<8x8xi32>
    %cst_17 = arith.constant 0.000000e+00 : f32
    %56 = vector.broadcast %cst_17 : f32 to vector<8x8xf32>
    %57 = arith.select %55, %56, %48 : vector<8x8xi1>, vector<8x8xf32>
    %cst_18 = arith.constant dense<0.000000e+00> : vector<8xf32>
    %58 = vector.multi_reduction <add>, %57, %cst_18 [0] : vector<8x8xf32> to vector<8xf32>
    %59 = vector.shape_cast %58 : vector<8xf32> to vector<1x8xf32>
    %cst_19 = arith.constant 0.000000e+00 : f32
    %60 = vector.shape_cast %59 : vector<1x8xf32> to vector<1x8xf32>
    %61 = vector.broadcast %60 : vector<1x8xf32> to vector<8x8xf32>
    %62 = vector.broadcast %cst_19 : f32 to vector<8x8xf32>
    %63 = arith.select %55, %61, %62 : vector<8x8xi1>, vector<8x8xf32>
    %cst_20 = arith.constant dense<0.000000e+00> : vector<8xf32>
    %64 = vector.multi_reduction <add>, %63, %cst_20 [1] : vector<8x8xf32> to vector<8xf32>
    %65 = vector.shape_cast %64 : vector<8xf32> to vector<8x1xf32>
    %c1_i32_21 = arith.constant 1 : i32
    %66 = vector.broadcast %c1_i32_21 : i32 to vector<8x8xi32>
    %67 = arith.cmpi eq, %53, %66 : vector<8x8xi32>
    %cst_22 = arith.constant 0.000000e+00 : f32
    %68 = vector.broadcast %cst_22 : f32 to vector<8x8xf32>
    %69 = arith.select %67, %45, %68 : vector<8x8xi1>, vector<8x8xf32>
    %cst_23 = arith.constant dense<0.000000e+00> : vector<8xf32>
    %70 = vector.multi_reduction <add>, %69, %cst_23 [1] : vector<8x8xf32> to vector<8xf32>
    %71 = vector.shape_cast %70 : vector<8xf32> to vector<8x1xf32>
    %72 = math.log %65 : vector<8x1xf32>
    %73 = arith.subf %72, %71 : vector<8x1xf32>
    %cst_24 = arith.constant 0.000000e+00 : f32
    %74 = vector.broadcast %cst_24 : f32 to vector<8x1xf32>
    %75 = arith.maximumf %73, %74 : vector<8x1xf32>
    %76 = arith.mulf %75, %75 : vector<8x1xf32>
    %77 = vector.shape_cast %76 : vector<8x1xf32> to vector<1x8x1xf32>
    %cst_25 = arith.constant dense<0.000000e+00> : vector<1xf32>
    %78 = vector.multi_reduction <add>, %77, %cst_25 [1, 2] : vector<1x8x1xf32> to vector<1xf32>
    %79 = vector.shape_cast %78 : vector<1xf32> to vector<1x1x1xf32>
    %80 = vector.extract %79[0, 0, 0] : f32 from vector<1x1x1xf32>
    %cst_26 = arith.constant 1.600000e+01 : f32
    %81 = arith.divf %80, %cst_26 : f32
    %cst_27 = arith.constant 2.000000e+00 : f32
    %82 = arith.mulf %cst_27, %81 : f32
    %83 = arith.addf %38, %82 : f32
    %c0_28 = arith.constant 0 : index
    %c0_29 = arith.constant 0 : index
    %84 = memref.load %arg2[%c0_28, %c0_29] : memref<1x1xf32, #tpu.memory_space<smem>>
    memref.store %83, %arg2[%c0_28, %c0_29] : memref<1x1xf32, #tpu.memory_space<smem>>
    return
  }
}

</mosaic_0001>

<llo_original>
// kernel: tpu_custom_call.1
$region0: #{tpu_custom_call.1}
  #allocation0 [shape = 'u32[]', space=smem, size = 0x4, offset = 0x4, fixed_abs, tag = 'smem constant byte address 0x4 - core index']
  #allocation1 [shape = 'u32[72,128]{1,0:T(1,128)}', space=vmem, size = 0x9000, scoped, tag = 'internal scratch']
  %s0 = inlined_call_operand.hbm [shape: f32[8,32], index: 0, kind: input, shape index: {}]
  %s1 = inlined_call_operand.hbm [shape: f32[8,32], index: 1, kind: input, shape index: {}]
  %s2 = inlined_call_operand.hbm [shape: f32[1,1], index: 2, kind: output, shape index: {}]
  %s3 = sld [smem:[#allocation0]]
  $region26: #{tpu_custom_call.1} parent=0
    _
  %s5 = ssub.s32 1, %s3
  %s6 = scalar_select 0, %s5, %s3
  $region1: #{tpu_custom_call.1} parent=0
    #allocation2 [shape = 'u8[4096]{0}', space=vmem, size = 0x1000, scoped, tag = 'input window, operand 0, single buffered']
    #allocation3 [shape = 's32[1]{0}', space=sflag, size = 0x4, scoped, tag = 'scoped memory for tpu_custom_call.1']
    #allocation4 [shape = 's32[1]{0}', space=sflag, size = 0x4, scoped, tag = 'scoped memory for tpu_custom_call.1']
    #allocation5 [shape = 'u8[4096]{0}', space=vmem, size = 0x1000, scoped, tag = 'input window, operand 1, single buffered']
    #allocation6 [shape = 's32[1]{0}', space=sflag, size = 0x4, scoped, tag = 'scoped memory for tpu_custom_call.1']
    #allocation7 [shape = 'u8[512]{0}', space=smem, size = 0x200, scoped, tag = 'output window, operand 0, single buffered']
    %7 = vsyncpa [#allocation3], 0
    %8 = vsyncpa [#allocation6], 0
    %9 = vsyncpa [#allocation4], 0
    // Predicated region
    $region2: #{tpu_custom_call.1} parent=1 // pred_check
      _
    $region3: #{tpu_custom_call.1} parent=1 // pred_check_branch
      %11 = sbr.rel (0) target = $region5
    $region4: #{tpu_custom_call.1} parent=1 // pred_region
      %13 = vsyncadd [#allocation3], 0
      %s15 = sshll.u32 %s0, 4
      %s16 = int_to_ptr.hbm [resolvable:$true] %s15
      %s17 = sshll.u32 [#allocation2], 4
      %s18 = int_to_ptr.vmem [resolvable:$true] %s17
      %20 = dma.hbm_to_vmem [thread:$0]  %s16, 128, %s18, [#allocation3]
    $region5: #{tpu_custom_call.1} parent=1 // pred_fallthru
      _
    // Predicated region
    $region6: #{tpu_custom_call.1} parent=1 // pred_check
      _
    $region7: #{tpu_custom_call.1} parent=1 // pred_check_branch
      %22 = sbr.rel (0) target = $region9
    $region8: #{tpu_custom_call.1} parent=1 // pred_region
      %24 = vsyncadd [#allocation6], 0
      %s26 = sshll.u32 %s1, 4
      %s27 = int_to_ptr.hbm [resolvable:$true] %s26
      %s28 = sshll.u32 [#allocation5], 4
      %s29 = int_to_ptr.vmem [resolvable:$true] %s28
      %31 = dma.hbm_to_vmem [thread:$0]  %s27, 128, %s29, [#allocation6]
    $region9: #{tpu_custom_call.1} parent=1 // pred_fallthru
      _
    // Predicated region
    $region10: #{tpu_custom_call.1} parent=1 // pred_check
      _
    $region11: #{tpu_custom_call.1} parent=1 // pred_check_branch
      %33 = sbr.rel (0) target = $region13
    $region12: #{tpu_custom_call.1} parent=1 // pred_region
      %35 = dma.done [#allocation3], 128
    $region13: #{tpu_custom_call.1} parent=1 // pred_fallthru
      _
    // Predicated region
    $region14: #{tpu_custom_call.1} parent=1 // pred_check
      _
    $region15: #{tpu_custom_call.1} parent=1 // pred_check_branch
      %37 = sbr.rel (0) target = $region17
    $region16: #{tpu_custom_call.1} parent=1 // pred_region
      %39 = dma.done [#allocation6], 128
    $region17: #{tpu_custom_call.1} parent=1 // pred_fallthru
      _
    %v40 = vld [vmem:[#allocation2] sm:$0xff]
    %v41 = vld [vmem:[#allocation5] sm:$0xff]
    %vm42 = vcmask 261120
    %v44 = vsel %vm42, %v40, 0
    %46 = vmatpush.xpose.msra.mxu0 0.0
    %47 = vmatpush.xpose.msra.mxu0 0.0
    %48 = vmatpush.xpose.msra.mxu0 0.0
    %49 = vmatpush.xpose.msra.mxu0 0.0
    %50 = vmatpush.xpose.msra.mxu0 0.0
    %51 = vmatpush.xpose.msra.mxu0 0.0
    %52 = vmatpush.xpose.msra.mxu0 0.0
    %53 = vmatpush.xpose.msra.mxu0 0.0
    %54 = vmatpush.xpose.msra.mxu0 0.0
    %55 = vmatpush.xpose.msra.mxu0 0.0
    %56 = vmatpush.xpose.msra.mxu0 0.0
    %57 = vmatpush.xpose.msra.mxu0 0.0
    %58 = vmatpush.xpose.msra.mxu0 0.0
    %59 = vmatpush.xpose.msra.mxu0 0.0
    %60 = vmatpush.xpose.msra.mxu0 0.0
    %61 = vmatpush.xpose.msra.mxu0 %v44
    %62 = vmatmul.f32.gmra.mxu0 %v44
    %v63 = vpop.f32.mrf.mxu0
    %v64 = vadd.f32 0.0, %v63
    %65 = vdwg.mxu0
    %v66 = vadd.f32 %v64, 0.5
    %v67 = vmul.f32 %v66, 1.442695
    %v68 = vpow.pop %v67
    %v69 = vlaneseq
    %v70 = vshrl.u32 %v69, 7
    %v71 = vlaneseq
    %v72 = vand.u32 %v71, 127
    %v73 = vxor.u32 %v70, %v72
    %vm74 = vcmp.lt.s32.totalorder %v73, 2
    %v75 = vsel %vm74, 0.0, %v68
    %vm76 = vcmask 64512
    %v77 = vsel %vm76, %v75, 0.0
    %v78 = vrot.slane %v77, 4
    %v79 = vadd.f32 %v77, %v78
    %v80 = vrot.slane %v79, 2
    %v81 = vadd.f32 %v79, %v80
    %v82 = vrot.slane %v81, 1
    %v83 = vadd.f32 %v81, %v82
    %v84 = vsel %vm74, %v83, 0.0
    %v85 = vsel %vm76, %v84, 0.0
    %86 = vadd.xlane.f32.xlu0 %v85
    %v87 = vpop.xlane.xlu0 %86
    %vm88 = vcmp.eq.s32.totalorder %v73, 1
    %v89 = vsel %vm88, %v64, 0.0
    %v90 = vsel %vm76, %v89, 0.0
    %91 = vadd.xlane.f32.xlu0 %v90
    %v92 = vpop.xlane.xlu0 %91
    %v93 = vlog2.pop %v87
    %v94 = vmul.f32 %v93, 0.6931472
    %v95 = vsub.f32 %v94, %v92
    %v96 = vmax.f32 %v95, 0.0
    %v97 = vmul.f32 %v96, %v96
    %vm98 = vcmask 7168
    %v99 = vsel %vm98, %v97, 0.0
    %100 = vadd.xlane.f32.xlu0 %v99
    %v101 = vpop.xlane.xlu0 %100
    %v102 = vrot.slane %v101, 4
    %v103 = vadd.f32 %v101, %v102
    %v104 = vrot.slane %v103, 2
    %v105 = vadd.f32 %v103, %v104
    %v106 = vrot.slane %v105, 1
    %v107 = vadd.f32 %v105, %v106
    %s108 = vtos %v107
    %v109 = vrcp.pop 16.0
    %v110 = vmul.f32 16.0, %v109
    %v111 = vsub.f32 1.0, %v110
    %v112 = vmul.f32 %v109, %v111
    %v113 = vadd.f32 %v109, %v112
    %vm114 = vweird.f32 %v109
    %v115 = vsel %vm114, %v109, %v113
    %s116 = vtos %v115
    %s117 = smul.f32 %s108, %s116
    %v118 = vand.u32 %v70, 1
    %vm119 = vcmp.eq.s32.totalorder %v118, 0
    %v120 = vsel %vm119, %v40, %v41
    %v122 = vsel %vm42, %v120, 0
    %124 = vmatpush.xpose.msra.mxu0 0.0
    %125 = vmatpush.xpose.msra.mxu0 0.0
    %126 = vmatpush.xpose.msra.mxu0 0.0
    %127 = vmatpush.xpose.msra.mxu0 0.0
    %128 = vmatpush.xpose.msra.mxu0 0.0
    %129 = vmatpush.xpose.msra.mxu0 0.0
    %130 = vmatpush.xpose.msra.mxu0 0.0
    %131 = vmatpush.xpose.msra.mxu0 0.0
    %132 = vmatpush.xpose.msra.mxu0 0.0
    %133 = vmatpush.xpose.msra.mxu0 0.0
    %134 = vmatpush.xpose.msra.mxu0 0.0
    %135 = vmatpush.xpose.msra.mxu0 0.0
    %136 = vmatpush.xpose.msra.mxu0 0.0
    %137 = vmatpush.xpose.msra.mxu0 0.0
    %138 = vmatpush.xpose.msra.mxu0 0.0
    %139 = vmatpush.xpose.msra.mxu0 %v122
    %140 = vmatmul.f32.gmra.mxu0 %v122
    %v141 = vpop.f32.mrf.mxu0
    %v142 = vadd.f32 0.0, %v141
    %143 = vdwg.mxu0
    %v144 = vadd.f32 %v142, 0.5
    %v145 = vmul.f32 %v144, 1.442695
    %v146 = vpow.pop %v145
    %v147 = vsel %vm74, 0.0, %v146
    %v148 = vsel %vm76, %v147, 0.0
    %v149 = vrot.slane %v148, 4
    %v150 = vadd.f32 %v148, %v149
    %v151 = vrot.slane %v150, 2
    %v152 = vadd.f32 %v150, %v151
    %v153 = vrot.slane %v152, 1
    %v154 = vadd.f32 %v152, %v153
    %v155 = vsel %vm74, %v154, 0.0
    %v156 = vsel %vm76, %v155, 0.0
    %157 = vadd.xlane.f32.xlu0 %v156
    %v158 = vpop.xlane.xlu0 %157
    %v159 = vsel %vm88, %v142, 0.0
    %v160 = vsel %vm76, %v159, 0.0
    %161 = vadd.xlane.f32.xlu0 %v160
    %v162 = vpop.xlane.xlu0 %161
    %v163 = vlog2.pop %v158
    %v164 = vmul.f32 %v163, 0.6931472
    %v165 = vsub.f32 %v164, %v162
    %v166 = vmax.f32 %v165, 0.0
    %v167 = vmul.f32 %v166, %v166
    %v168 = vsel %vm98, %v167, 0.0
    %169 = vadd.xlane.f32.xlu0 %v168
    %v170 = vpop.xlane.xlu0 %169
    %v171 = vrot.slane %v170, 4
    %v172 = vadd.f32 %v170, %v171
    %v173 = vrot.slane %v172, 2
    %v174 = vadd.f32 %v172, %v173
    %v175 = vrot.slane %v174, 1
    %v176 = vadd.f32 %v174, %v175
    %s177 = vtos %v176
    %v178 = vrcp.pop 16.0
    %v179 = vmul.f32 16.0, %v178
    %v180 = vsub.f32 1.0, %v179
    %v181 = vmul.f32 %v178, %v180
    %v182 = vadd.f32 %v178, %v181
    %vm183 = vweird.f32 %v178
    %v184 = vsel %vm183, %v178, %v182
    %s185 = vtos %v184
    %s186 = smul.f32 %s177, %s185
    %s187 = smul.f32 %s186, 2.0
    %s188 = sadd.f32 %s117, %s187
    %s189 = scalar_lea.smem [#allocation7], 0
    %190 = sst [smem:[%s189]] %s188
    // Predicated region
    $region18: #{tpu_custom_call.1} parent=1 // pred_check
      _
    $region19: #{tpu_custom_call.1} parent=1 // pred_check_branch
      %192 = sbr.rel (0) target = $region21
    $region20: #{tpu_custom_call.1} parent=1 // pred_region
      %194 = vsyncadd [#allocation4], 0
      %s196 = sshll.u32 %s2, 4
      %s197 = int_to_ptr.hbm [resolvable:$true] %s196
      %199 = dma.smem_to_hbm [#allocation7], 16, %s197, [#allocation4]
    $region21: #{tpu_custom_call.1} parent=1 // pred_fallthru
      _
    // Predicated region
    $region22: #{tpu_custom_call.1} parent=1 // pred_check
      _
    $region23: #{tpu_custom_call.1} parent=1 // pred_check_branch
      %201 = sbr.rel (0) target = $region25
    $region24: #{tpu_custom_call.1} parent=1 // pred_region
      %203 = dma.done [#allocation4], 16
    $region25: #{tpu_custom_call.1} parent=1 // pred_fallthru
      _
    %204 = sfence
    %205 = vsyncpa [#allocation3], 1
    %206 = vsyncpa [#allocation6], 1
    %207 = vsyncpa [#allocation4], 1

</llo_original>
